<compile_context>
chip_gen: v6e
topology: v6e:2x2x1
jax: 0.10.0
libtpu: 0.0.40
codegen_flags: <defaults>
</compile_context>

<pallas_src>
import jax
import jax.numpy as jnp
from jax.experimental import pallas as pl
from jax.experimental.pallas import tpu as pltpu


def _shrink_kernel(d_ref, w_ref, b_ref, o_ref):
    # d_ref / o_ref: (nb, C, tr, L) tile of D, spatial plane (tr, L) per channel.
    # w_ref: SMEM (6*C*C,) = [w1 (C*C) | w1r (C*2C) | w2 (C*C) | w2r (C*2C)] row-major.
    # b_ref: SMEM (4*C,)   = [b1 | b1r | b2 | b2r].
    nb, C = d_ref.shape[0], d_ref.shape[1]
    csq = C * C

    # Hoist all scalar SMEM reads out of the per-batch loop (cheap scalar slot).
    w = [w_ref[i] for i in range(6 * csq)]
    b = [b_ref[i] for i in range(4 * C)]

    def mix(w_off, b_off, inputs):
        """out_c = sum_i w[w_off + c*len(inputs) + i] * inputs[i] + b[b_off + c]."""
        n_in = len(inputs)
        outs = []
        for c in range(C):
            base = w_off + c * n_in
            acc = inputs[0] * w[base]
            for i in range(1, n_in):
                acc = acc + inputs[i] * w[base + i]
            outs.append(acc + b[b_off + c])
        return outs

    relu = lambda v: jnp.maximum(v, 0.0)

    for bi in range(nb):
        d = [d_ref[bi, c].astype(jnp.float32) for c in range(C)]
        env = [jnp.abs(v) for v in d]

        # convblock1: 1x1 conv (C->C) + ReLU
        conv1 = [relu(v) for v in mix(0, 0, env)]
        # convblock1res: 1x1 conv on concat([conv1, env]) (2C->C) + ReLU
        convr1 = [relu(v) for v in mix(csq, C, conv1 + env)]
        # convblock2: 1x1 conv (C->C) + ReLU
        conv2 = [relu(v) for v in mix(3 * csq, 2 * C, convr1)]
        # convblock2res: 1x1 conv on concat([conv2, convr1]) (2C->C) + Sigmoid
        logits = mix(4 * csq, 3 * C, conv2 + convr1)

        for c in range(C):
            # sigmoid(x) == 0.5 * tanh(0.5 * x) + 0.5 ; tanh lands on the EUP slot.
            gate = 0.5 * jnp.tanh(0.5 * logits[c]) + 0.5
            o_ref[bi, c] = (gate * d[c]).astype(o_ref.dtype)


def shrink_dhsn1_pallas(D, params, *, tile_elems=32768, max_batch_block=8):
    """D: (N, C, H, W) float32.  params: dict of weights/biases (see init_params)."""
    N, C, H, W = D.shape
    S = H * W

    if S % 128 == 0:
        # Dense layout: per-channel spatial plane is (R, 128), fully vreg-dense.
        L = 128
        R = S // 128
        rows_target = max(8, tile_elems // 128)          # ~512 KiB of f32 per C=4 tile
        if R <= rows_target:
            tr = R
            # Fold several batch elements per step so small images amortize the
            # ~0.35 us per-grid-step overhead.
            nb = min(N, max_batch_block, max(1, rows_target // max(R, 1)))
            # Keep >= 2 grid steps when possible so a dual-TC chip (v7x) gets
            # work on both cores.
            if pl.cdiv(N, nb) * pl.cdiv(R, tr) < 2 and N >= 2:
                nb = (N + 1) // 2
        else:
            nb = 1
            tr = rows_target
            if N * pl.cdiv(R, tr) < 2 and R >= 16:
                tr = (((R + 1) // 2) + 7) // 8 * 8       # split one image across 2 steps
    else:
        # TODO(synk): spatial sizes not divisible by 128 fall back to a single
        # whole-image spatial block (half-empty sublanes, no spatial tiling);
        # extremely large such images could exceed the scoped VMEM limit.
        L, R, tr = S, 1, 1
        nb = min(N, max_batch_block)
        if pl.cdiv(N, nb) < 2 and N >= 2:
            nb = (N + 1) // 2

    x = D.reshape(N, C, R, L)                             # zero-cost NCHW view
    grid = (pl.cdiv(N, nb), pl.cdiv(R, tr))

    # Flatten all weights/biases into 1-D SMEM-resident arrays of 32-bit scalars.
    w_flat = jnp.concatenate([
        params["w1"].reshape(-1),     # (C*C,)
        params["w1r"].reshape(-1),    # (C*2C,)
        params["w2"].reshape(-1),     # (C*C,)
        params["w2r"].reshape(-1),    # (C*2C,)
    ])
    b_flat = jnp.concatenate([params["b1"], params["b1r"],
                              params["b2"], params["b2r"]])   # (4C,)

    d_spec = pl.BlockSpec((nb, C, tr, L), lambda n, s: (n, 0, s, 0))
    smem_spec = pl.BlockSpec(memory_space=pltpu.MemorySpace.SMEM)

    out = pl.pallas_call(
        _shrink_kernel,
        out_shape=jax.ShapeDtypeStruct((N, C, R, L), D.dtype),
        grid_spec=pltpu.PrefetchScalarGridSpec(
            num_scalar_prefetch=0,
            grid=grid,
            in_specs=[d_spec, smem_spec, smem_spec],
            out_specs=d_spec,
        ),
        compiler_params=pltpu.CompilerParams(
            dimension_semantics=("parallel", "parallel")),
    )(x, w_flat, b_flat)

    return out.reshape(N, C, H, W)


def init_params(key, no_fmaps):
    """Deterministic synthetic parameters matching the PyTorch module shapes."""
    C = no_fmaps
    ks = jax.random.split(key, 8)
    scale = 0.1
    return {
        # nn.Conv2d(C, C, 1): weight (C, C, 1, 1) -> stored as (C_out, C_in)
        "w1":  scale * jax.random.normal(ks[0], (C, C), jnp.float32),
        "b1":  scale * jax.random.normal(ks[1], (C,), jnp.float32),
        # nn.Conv2d(2C, C, 1): weight (C_out, 2C_in)
        "w1r": scale * jax.random.normal(ks[2], (C, 2 * C), jnp.float32),
        "b1r": scale * jax.random.normal(ks[3], (C,), jnp.float32),
        "w2":  scale * jax.random.normal(ks[4], (C, C), jnp.float32),
        "b2":  scale * jax.random.normal(ks[5], (C,), jnp.float32),
        "w2r": scale * jax.random.normal(ks[6], (C, 2 * C), jnp.float32),
        "b2r": scale * jax.random.normal(ks[7], (C,), jnp.float32),
    }


def shrink_dhsn1_ref(D, params):
    """Pure-JAX reference (NCHW), used for a correctness sanity check."""
    N, C, H, W = D.shape
    x = D.reshape(N, C, H * W)
    env = jnp.abs(x)
    relu = lambda v: jnp.maximum(v, 0.0)

    def conv1x1(w, b, inp):  # out[n,o,s] = sum_i w[o,i] * inp[n,i,s] + b[o]
        return jnp.einsum("oi,nis->nos", w, inp) + b[None, :, None]

    conv1 = relu(conv1x1(params["w1"], params["b1"], env))
    convr1 = relu(conv1x1(params["w1r"], params["b1r"],
                          jnp.concatenate([conv1, env], axis=1)))
    conv2 = relu(conv1x1(params["w2"], params["b2"], convr1))
    convr2 = jax.nn.sigmoid(conv1x1(params["w2r"], params["b2r"],
                                    jnp.concatenate([conv2, convr1], axis=1)))
    return (convr2 * x).reshape(N, C, H, W)


if __name__ == "__main__":
    key = jax.random.PRNGKey(0)
    k_x, k_p = jax.random.split(key)

    N, C, H, W = 2, 4, 16, 16  # no_fmaps = 4
    D = jax.random.normal(k_x, (N, C, H, W), jnp.float32)
    params = init_params(k_p, C)

    out = shrink_dhsn1_pallas(D, params)
    out = jax.block_until_ready(out)

    ref = shrink_dhsn1_ref(D, params)
    assert out.shape == (N, C, H, W)
    assert jnp.allclose(out, ref, atol=1e-5, rtol=1e-5), "mismatch vs reference"

    print("KERNEL_OK")
</pallas_src>

<mosaic_0001>
module attributes {stable_mosaic.version = 11 : i64} {
  func.func @_shrink_kernel(%arg0: i32, %arg1: i32, %arg2: memref<1x4x2x128xf32, #tpu.memory_space<vmem>>, %arg3: memref<96xf32, #tpu.memory_space<smem>>, %arg4: memref<16xf32, #tpu.memory_space<smem>>, %arg5: memref<1x4x2x128xf32, #tpu.memory_space<vmem>>) attributes {dimension_semantics = [#tpu.dimension_semantics<parallel>, #tpu.dimension_semantics<parallel>], iteration_bounds = array<i64: 2, 1>, scalar_prefetch = 0 : i64, scratch_operands = 0 : i64, tpu.core_type = #tpu.core_type<tc>, window_params = [{transform_indices = @transform_0, window_bounds = array<i64: 1, 4, 2, 128>}, {transform_indices = @transform_1, window_bounds = array<i64: 96>}, {transform_indices = @transform_2, window_bounds = array<i64: 16>}, {transform_indices = @transform_3, window_bounds = array<i64: 1, 4, 2, 128>}]} {
    %c0 = arith.constant 0 : index
    %0 = memref.load %arg3[%c0] : memref<96xf32, #tpu.memory_space<smem>>
    %c1 = arith.constant 1 : index
    %1 = memref.load %arg3[%c1] : memref<96xf32, #tpu.memory_space<smem>>
    %c2 = arith.constant 2 : index
    %2 = memref.load %arg3[%c2] : memref<96xf32, #tpu.memory_space<smem>>
    %c3 = arith.constant 3 : index
    %3 = memref.load %arg3[%c3] : memref<96xf32, #tpu.memory_space<smem>>
    %c4 = arith.constant 4 : index
    %4 = memref.load %arg3[%c4] : memref<96xf32, #tpu.memory_space<smem>>
    %c5 = arith.constant 5 : index
    %5 = memref.load %arg3[%c5] : memref<96xf32, #tpu.memory_space<smem>>
    %c6 = arith.constant 6 : index
    %6 = memref.load %arg3[%c6] : memref<96xf32, #tpu.memory_space<smem>>
    %c7 = arith.constant 7 : index
    %7 = memref.load %arg3[%c7] : memref<96xf32, #tpu.memory_space<smem>>
    %c8 = arith.constant 8 : index
    %8 = memref.load %arg3[%c8] : memref<96xf32, #tpu.memory_space<smem>>
    %c9 = arith.constant 9 : index
    %9 = memref.load %arg3[%c9] : memref<96xf32, #tpu.memory_space<smem>>
    %c10 = arith.constant 10 : index
    %10 = memref.load %arg3[%c10] : memref<96xf32, #tpu.memory_space<smem>>
    %c11 = arith.constant 11 : index
    %11 = memref.load %arg3[%c11] : memref<96xf32, #tpu.memory_space<smem>>
    %c12 = arith.constant 12 : index
    %12 = memref.load %arg3[%c12] : memref<96xf32, #tpu.memory_space<smem>>
    %c13 = arith.constant 13 : index
    %13 = memref.load %arg3[%c13] : memref<96xf32, #tpu.memory_space<smem>>
    %c14 = arith.constant 14 : index
    %14 = memref.load %arg3[%c14] : memref<96xf32, #tpu.memory_space<smem>>
    %c15 = arith.constant 15 : index
    %15 = memref.load %arg3[%c15] : memref<96xf32, #tpu.memory_space<smem>>
    %c16 = arith.constant 16 : index
    %16 = memref.load %arg3[%c16] : memref<96xf32, #tpu.memory_space<smem>>
    %c17 = arith.constant 17 : index
    %17 = memref.load %arg3[%c17] : memref<96xf32, #tpu.memory_space<smem>>
    %c18 = arith.constant 18 : index
    %18 = memref.load %arg3[%c18] : memref<96xf32, #tpu.memory_space<smem>>
    %c19 = arith.constant 19 : index
    %19 = memref.load %arg3[%c19] : memref<96xf32, #tpu.memory_space<smem>>
    %c20 = arith.constant 20 : index
    %20 = memref.load %arg3[%c20] : memref<96xf32, #tpu.memory_space<smem>>
    %c21 = arith.constant 21 : index
    %21 = memref.load %arg3[%c21] : memref<96xf32, #tpu.memory_space<smem>>
    %c22 = arith.constant 22 : index
    %22 = memref.load %arg3[%c22] : memref<96xf32, #tpu.memory_space<smem>>
    %c23 = arith.constant 23 : index
    %23 = memref.load %arg3[%c23] : memref<96xf32, #tpu.memory_space<smem>>
    %c24 = arith.constant 24 : index
    %24 = memref.load %arg3[%c24] : memref<96xf32, #tpu.memory_space<smem>>
    %c25 = arith.constant 25 : index
    %25 = memref.load %arg3[%c25] : memref<96xf32, #tpu.memory_space<smem>>
    %c26 = arith.constant 26 : index
    %26 = memref.load %arg3[%c26] : memref<96xf32, #tpu.memory_space<smem>>
    %c27 = arith.constant 27 : index
    %27 = memref.load %arg3[%c27] : memref<96xf32, #tpu.memory_space<smem>>
    %c28 = arith.constant 28 : index
    %28 = memref.load %arg3[%c28] : memref<96xf32, #tpu.memory_space<smem>>
    %c29 = arith.constant 29 : index
    %29 = memref.load %arg3[%c29] : memref<96xf32, #tpu.memory_space<smem>>
    %c30 = arith.constant 30 : index
    %30 = memref.load %arg3[%c30] : memref<96xf32, #tpu.memory_space<smem>>
    %c31 = arith.constant 31 : index
    %31 = memref.load %arg3[%c31] : memref<96xf32, #tpu.memory_space<smem>>
    %c32 = arith.constant 32 : index
    %32 = memref.load %arg3[%c32] : memref<96xf32, #tpu.memory_space<smem>>
    %c33 = arith.constant 33 : index
    %33 = memref.load %arg3[%c33] : memref<96xf32, #tpu.memory_space<smem>>
    %c34 = arith.constant 34 : index
    %34 = memref.load %arg3[%c34] : memref<96xf32, #tpu.memory_space<smem>>
    %c35 = arith.constant 35 : index
    %35 = memref.load %arg3[%c35] : memref<96xf32, #tpu.memory_space<smem>>
    %c36 = arith.constant 36 : index
    %36 = memref.load %arg3[%c36] : memref<96xf32, #tpu.memory_space<smem>>
    %c37 = arith.constant 37 : index
    %37 = memref.load %arg3[%c37] : memref<96xf32, #tpu.memory_space<smem>>
    %c38 = arith.constant 38 : index
    %38 = memref.load %arg3[%c38] : memref<96xf32, #tpu.memory_space<smem>>
    %c39 = arith.constant 39 : index
    %39 = memref.load %arg3[%c39] : memref<96xf32, #tpu.memory_space<smem>>
    %c40 = arith.constant 40 : index
    %40 = memref.load %arg3[%c40] : memref<96xf32, #tpu.memory_space<smem>>
    %c41 = arith.constant 41 : index
    %41 = memref.load %arg3[%c41] : memref<96xf32, #tpu.memory_space<smem>>
    %c42 = arith.constant 42 : index
    %42 = memref.load %arg3[%c42] : memref<96xf32, #tpu.memory_space<smem>>
    %c43 = arith.constant 43 : index
    %43 = memref.load %arg3[%c43] : memref<96xf32, #tpu.memory_space<smem>>
    %c44 = arith.constant 44 : index
    %44 = memref.load %arg3[%c44] : memref<96xf32, #tpu.memory_space<smem>>
    %c45 = arith.constant 45 : index
    %45 = memref.load %arg3[%c45] : memref<96xf32, #tpu.memory_space<smem>>
    %c46 = arith.constant 46 : index
    %46 = memref.load %arg3[%c46] : memref<96xf32, #tpu.memory_space<smem>>
    %c47 = arith.constant 47 : index
    %47 = memref.load %arg3[%c47] : memref<96xf32, #tpu.memory_space<smem>>
    %c48 = arith.constant 48 : index
    %48 = memref.load %arg3[%c48] : memref<96xf32, #tpu.memory_space<smem>>
    %c49 = arith.constant 49 : index
    %49 = memref.load %arg3[%c49] : memref<96xf32, #tpu.memory_space<smem>>
    %c50 = arith.constant 50 : index
    %50 = memref.load %arg3[%c50] : memref<96xf32, #tpu.memory_space<smem>>
    %c51 = arith.constant 51 : index
    %51 = memref.load %arg3[%c51] : memref<96xf32, #tpu.memory_space<smem>>
    %c52 = arith.constant 52 : index
    %52 = memref.load %arg3[%c52] : memref<96xf32, #tpu.memory_space<smem>>
    %c53 = arith.constant 53 : index
    %53 = memref.load %arg3[%c53] : memref<96xf32, #tpu.memory_space<smem>>
    %c54 = arith.constant 54 : index
    %54 = memref.load %arg3[%c54] : memref<96xf32, #tpu.memory_space<smem>>
    %c55 = arith.constant 55 : index
    %55 = memref.load %arg3[%c55] : memref<96xf32, #tpu.memory_space<smem>>
    %c56 = arith.constant 56 : index
    %56 = memref.load %arg3[%c56] : memref<96xf32, #tpu.memory_space<smem>>
    %c57 = arith.constant 57 : index
    %57 = memref.load %arg3[%c57] : memref<96xf32, #tpu.memory_space<smem>>
    %c58 = arith.constant 58 : index
    %58 = memref.load %arg3[%c58] : memref<96xf32, #tpu.memory_space<smem>>
    %c59 = arith.constant 59 : index
    %59 = memref.load %arg3[%c59] : memref<96xf32, #tpu.memory_space<smem>>
    %c60 = arith.constant 60 : index
    %60 = memref.load %arg3[%c60] : memref<96xf32, #tpu.memory_space<smem>>
    %c61 = arith.constant 61 : index
    %61 = memref.load %arg3[%c61] : memref<96xf32, #tpu.memory_space<smem>>
    %c62 = arith.constant 62 : index
    %62 = memref.load %arg3[%c62] : memref<96xf32, #tpu.memory_space<smem>>
    %c63 = arith.constant 63 : index
    %63 = memref.load %arg3[%c63] : memref<96xf32, #tpu.memory_space<smem>>
    %c64 = arith.constant 64 : index
    %64 = memref.load %arg3[%c64] : memref<96xf32, #tpu.memory_space<smem>>
    %c65 = arith.constant 65 : index
    %65 = memref.load %arg3[%c65] : memref<96xf32, #tpu.memory_space<smem>>
    %c66 = arith.constant 66 : index
    %66 = memref.load %arg3[%c66] : memref<96xf32, #tpu.memory_space<smem>>
    %c67 = arith.constant 67 : index
    %67 = memref.load %arg3[%c67] : memref<96xf32, #tpu.memory_space<smem>>
    %c68 = arith.constant 68 : index
    %68 = memref.load %arg3[%c68] : memref<96xf32, #tpu.memory_space<smem>>
    %c69 = arith.constant 69 : index
    %69 = memref.load %arg3[%c69] : memref<96xf32, #tpu.memory_space<smem>>
    %c70 = arith.constant 70 : index
    %70 = memref.load %arg3[%c70] : memref<96xf32, #tpu.memory_space<smem>>
    %c71 = arith.constant 71 : index
    %71 = memref.load %arg3[%c71] : memref<96xf32, #tpu.memory_space<smem>>
    %c72 = arith.constant 72 : index
    %72 = memref.load %arg3[%c72] : memref<96xf32, #tpu.memory_space<smem>>
    %c73 = arith.constant 73 : index
    %73 = memref.load %arg3[%c73] : memref<96xf32, #tpu.memory_space<smem>>
    %c74 = arith.constant 74 : index
    %74 = memref.load %arg3[%c74] : memref<96xf32, #tpu.memory_space<smem>>
    %c75 = arith.constant 75 : index
    %75 = memref.load %arg3[%c75] : memref<96xf32, #tpu.memory_space<smem>>
    %c76 = arith.constant 76 : index
    %76 = memref.load %arg3[%c76] : memref<96xf32, #tpu.memory_space<smem>>
    %c77 = arith.constant 77 : index
    %77 = memref.load %arg3[%c77] : memref<96xf32, #tpu.memory_space<smem>>
    %c78 = arith.constant 78 : index
    %78 = memref.load %arg3[%c78] : memref<96xf32, #tpu.memory_space<smem>>
    %c79 = arith.constant 79 : index
    %79 = memref.load %arg3[%c79] : memref<96xf32, #tpu.memory_space<smem>>
    %c80 = arith.constant 80 : index
    %80 = memref.load %arg3[%c80] : memref<96xf32, #tpu.memory_space<smem>>
    %c81 = arith.constant 81 : index
    %81 = memref.load %arg3[%c81] : memref<96xf32, #tpu.memory_space<smem>>
    %c82 = arith.constant 82 : index
    %82 = memref.load %arg3[%c82] : memref<96xf32, #tpu.memory_space<smem>>
    %c83 = arith.constant 83 : index
    %83 = memref.load %arg3[%c83] : memref<96xf32, #tpu.memory_space<smem>>
    %c84 = arith.constant 84 : index
    %84 = memref.load %arg3[%c84] : memref<96xf32, #tpu.memory_space<smem>>
    %c85 = arith.constant 85 : index
    %85 = memref.load %arg3[%c85] : memref<96xf32, #tpu.memory_space<smem>>
    %c86 = arith.constant 86 : index
    %86 = memref.load %arg3[%c86] : memref<96xf32, #tpu.memory_space<smem>>
    %c87 = arith.constant 87 : index
    %87 = memref.load %arg3[%c87] : memref<96xf32, #tpu.memory_space<smem>>
    %c88 = arith.constant 88 : index
    %88 = memref.load %arg3[%c88] : memref<96xf32, #tpu.memory_space<smem>>
    %c89 = arith.constant 89 : index
    %89 = memref.load %arg3[%c89] : memref<96xf32, #tpu.memory_space<smem>>
    %c90 = arith.constant 90 : index
    %90 = memref.load %arg3[%c90] : memref<96xf32, #tpu.memory_space<smem>>
    %c91 = arith.constant 91 : index
    %91 = memref.load %arg3[%c91] : memref<96xf32, #tpu.memory_space<smem>>
    %c92 = arith.constant 92 : index
    %92 = memref.load %arg3[%c92] : memref<96xf32, #tpu.memory_space<smem>>
    %c93 = arith.constant 93 : index
    %93 = memref.load %arg3[%c93] : memref<96xf32, #tpu.memory_space<smem>>
    %c94 = arith.constant 94 : index
    %94 = memref.load %arg3[%c94] : memref<96xf32, #tpu.memory_space<smem>>
    %c95 = arith.constant 95 : index
    %95 = memref.load %arg3[%c95] : memref<96xf32, #tpu.memory_space<smem>>
    %c0_0 = arith.constant 0 : index
    %96 = memref.load %arg4[%c0_0] : memref<16xf32, #tpu.memory_space<smem>>
    %c1_1 = arith.constant 1 : index
    %97 = memref.load %arg4[%c1_1] : memref<16xf32, #tpu.memory_space<smem>>
    %c2_2 = arith.constant 2 : index
    %98 = memref.load %arg4[%c2_2] : memref<16xf32, #tpu.memory_space<smem>>
    %c3_3 = arith.constant 3 : index
    %99 = memref.load %arg4[%c3_3] : memref<16xf32, #tpu.memory_space<smem>>
    %c4_4 = arith.constant 4 : index
    %100 = memref.load %arg4[%c4_4] : memref<16xf32, #tpu.memory_space<smem>>
    %c5_5 = arith.constant 5 : index
    %101 = memref.load %arg4[%c5_5] : memref<16xf32, #tpu.memory_space<smem>>
    %c6_6 = arith.constant 6 : index
    %102 = memref.load %arg4[%c6_6] : memref<16xf32, #tpu.memory_space<smem>>
    %c7_7 = arith.constant 7 : index
    %103 = memref.load %arg4[%c7_7] : memref<16xf32, #tpu.memory_space<smem>>
    %c8_8 = arith.constant 8 : index
    %104 = memref.load %arg4[%c8_8] : memref<16xf32, #tpu.memory_space<smem>>
    %c9_9 = arith.constant 9 : index
    %105 = memref.load %arg4[%c9_9] : memref<16xf32, #tpu.memory_space<smem>>
    %c10_10 = arith.constant 10 : index
    %106 = memref.load %arg4[%c10_10] : memref<16xf32, #tpu.memory_space<smem>>
    %c11_11 = arith.constant 11 : index
    %107 = memref.load %arg4[%c11_11] : memref<16xf32, #tpu.memory_space<smem>>
    %c12_12 = arith.constant 12 : index
    %108 = memref.load %arg4[%c12_12] : memref<16xf32, #tpu.memory_space<smem>>
    %c13_13 = arith.constant 13 : index
    %109 = memref.load %arg4[%c13_13] : memref<16xf32, #tpu.memory_space<smem>>
    %c14_14 = arith.constant 14 : index
    %110 = memref.load %arg4[%c14_14] : memref<16xf32, #tpu.memory_space<smem>>
    %c15_15 = arith.constant 15 : index
    %111 = memref.load %arg4[%c15_15] : memref<16xf32, #tpu.memory_space<smem>>
    %c0_16 = arith.constant 0 : index
    %c0_17 = arith.constant 0 : index
    %c0_18 = arith.constant 0 : index
    %c0_19 = arith.constant 0 : index
    %112 = vector.load %arg2[%c0_16, %c0_17, %c0_18, %c0_19] : memref<1x4x2x128xf32, #tpu.memory_space<vmem>>, vector<1x1x2x128xf32>
    %113 = vector.shape_cast %112 : vector<1x1x2x128xf32> to vector<2x128xf32>
    %c0_20 = arith.constant 0 : index
    %c1_21 = arith.constant 1 : index
    %c0_22 = arith.constant 0 : index
    %c0_23 = arith.constant 0 : index
    %114 = vector.load %arg2[%c0_20, %c1_21, %c0_22, %c0_23] : memref<1x4x2x128xf32, #tpu.memory_space<vmem>>, vector<1x1x2x128xf32>
    %115 = vector.shape_cast %114 : vector<1x1x2x128xf32> to vector<2x128xf32>
    %c0_24 = arith.constant 0 : index
    %c2_25 = arith.constant 2 : index
    %c0_26 = arith.constant 0 : index
    %c0_27 = arith.constant 0 : index
    %116 = vector.load %arg2[%c0_24, %c2_25, %c0_26, %c0_27] : memref<1x4x2x128xf32, #tpu.memory_space<vmem>>, vector<1x1x2x128xf32>
    %117 = vector.shape_cast %116 : vector<1x1x2x128xf32> to vector<2x128xf32>
    %c0_28 = arith.constant 0 : index
    %c3_29 = arith.constant 3 : index
    %c0_30 = arith.constant 0 : index
    %c0_31 = arith.constant 0 : index
    %118 = vector.load %arg2[%c0_28, %c3_29, %c0_30, %c0_31] : memref<1x4x2x128xf32, #tpu.memory_space<vmem>>, vector<1x1x2x128xf32>
    %119 = vector.shape_cast %118 : vector<1x1x2x128xf32> to vector<2x128xf32>
    %120 = math.absf %113 : vector<2x128xf32>
    %121 = math.absf %115 : vector<2x128xf32>
    %122 = math.absf %117 : vector<2x128xf32>
    %123 = math.absf %119 : vector<2x128xf32>
    %124 = vector.broadcast %0 : f32 to vector<2x128xf32>
    %125 = arith.mulf %120, %124 : vector<2x128xf32>
    %126 = vector.broadcast %1 : f32 to vector<2x128xf32>
    %127 = arith.mulf %121, %126 : vector<2x128xf32>
    %128 = arith.addf %125, %127 : vector<2x128xf32>
    %129 = vector.broadcast %2 : f32 to vector<2x128xf32>
    %130 = arith.mulf %122, %129 : vector<2x128xf32>
    %131 = arith.addf %128, %130 : vector<2x128xf32>
    %132 = vector.broadcast %3 : f32 to vector<2x128xf32>
    %133 = arith.mulf %123, %132 : vector<2x128xf32>
    %134 = arith.addf %131, %133 : vector<2x128xf32>
    %135 = vector.broadcast %96 : f32 to vector<2x128xf32>
    %136 = arith.addf %134, %135 : vector<2x128xf32>
    %137 = vector.broadcast %4 : f32 to vector<2x128xf32>
    %138 = arith.mulf %120, %137 : vector<2x128xf32>
    %139 = vector.broadcast %5 : f32 to vector<2x128xf32>
    %140 = arith.mulf %121, %139 : vector<2x128xf32>
    %141 = arith.addf %138, %140 : vector<2x128xf32>
    %142 = vector.broadcast %6 : f32 to vector<2x128xf32>
    %143 = arith.mulf %122, %142 : vector<2x128xf32>
    %144 = arith.addf %141, %143 : vector<2x128xf32>
    %145 = vector.broadcast %7 : f32 to vector<2x128xf32>
    %146 = arith.mulf %123, %145 : vector<2x128xf32>
    %147 = arith.addf %144, %146 : vector<2x128xf32>
    %148 = vector.broadcast %97 : f32 to vector<2x128xf32>
    %149 = arith.addf %147, %148 : vector<2x128xf32>
    %150 = vector.broadcast %8 : f32 to vector<2x128xf32>
    %151 = arith.mulf %120, %150 : vector<2x128xf32>
    %152 = vector.broadcast %9 : f32 to vector<2x128xf32>
    %153 = arith.mulf %121, %152 : vector<2x128xf32>
    %154 = arith.addf %151, %153 : vector<2x128xf32>
    %155 = vector.broadcast %10 : f32 to vector<2x128xf32>
    %156 = arith.mulf %122, %155 : vector<2x128xf32>
    %157 = arith.addf %154, %156 : vector<2x128xf32>
    %158 = vector.broadcast %11 : f32 to vector<2x128xf32>
    %159 = arith.mulf %123, %158 : vector<2x128xf32>
    %160 = arith.addf %157, %159 : vector<2x128xf32>
    %161 = vector.broadcast %98 : f32 to vector<2x128xf32>
    %162 = arith.addf %160, %161 : vector<2x128xf32>
    %163 = vector.broadcast %12 : f32 to vector<2x128xf32>
    %164 = arith.mulf %120, %163 : vector<2x128xf32>
    %165 = vector.broadcast %13 : f32 to vector<2x128xf32>
    %166 = arith.mulf %121, %165 : vector<2x128xf32>
    %167 = arith.addf %164, %166 : vector<2x128xf32>
    %168 = vector.broadcast %14 : f32 to vector<2x128xf32>
    %169 = arith.mulf %122, %168 : vector<2x128xf32>
    %170 = arith.addf %167, %169 : vector<2x128xf32>
    %171 = vector.broadcast %15 : f32 to vector<2x128xf32>
    %172 = arith.mulf %123, %171 : vector<2x128xf32>
    %173 = arith.addf %170, %172 : vector<2x128xf32>
    %174 = vector.broadcast %99 : f32 to vector<2x128xf32>
    %175 = arith.addf %173, %174 : vector<2x128xf32>
    %cst = arith.constant 0.000000e+00 : f32
    %176 = vector.broadcast %cst : f32 to vector<2x128xf32>
    %177 = arith.maximumf %136, %176 : vector<2x128xf32>
    %cst_32 = arith.constant 0.000000e+00 : f32
    %178 = vector.broadcast %cst_32 : f32 to vector<2x128xf32>
    %179 = arith.maximumf %149, %178 : vector<2x128xf32>
    %cst_33 = arith.constant 0.000000e+00 : f32
    %180 = vector.broadcast %cst_33 : f32 to vector<2x128xf32>
    %181 = arith.maximumf %162, %180 : vector<2x128xf32>
    %cst_34 = arith.constant 0.000000e+00 : f32
    %182 = vector.broadcast %cst_34 : f32 to vector<2x128xf32>
    %183 = arith.maximumf %175, %182 : vector<2x128xf32>
    %184 = vector.broadcast %16 : f32 to vector<2x128xf32>
    %185 = arith.mulf %177, %184 : vector<2x128xf32>
    %186 = vector.broadcast %17 : f32 to vector<2x128xf32>
    %187 = arith.mulf %179, %186 : vector<2x128xf32>
    %188 = arith.addf %185, %187 : vector<2x128xf32>
    %189 = vector.broadcast %18 : f32 to vector<2x128xf32>
    %190 = arith.mulf %181, %189 : vector<2x128xf32>
    %191 = arith.addf %188, %190 : vector<2x128xf32>
    %192 = vector.broadcast %19 : f32 to vector<2x128xf32>
    %193 = arith.mulf %183, %192 : vector<2x128xf32>
    %194 = arith.addf %191, %193 : vector<2x128xf32>
    %195 = vector.broadcast %20 : f32 to vector<2x128xf32>
    %196 = arith.mulf %120, %195 : vector<2x128xf32>
    %197 = arith.addf %194, %196 : vector<2x128xf32>
    %198 = vector.broadcast %21 : f32 to vector<2x128xf32>
    %199 = arith.mulf %121, %198 : vector<2x128xf32>
    %200 = arith.addf %197, %199 : vector<2x128xf32>
    %201 = vector.broadcast %22 : f32 to vector<2x128xf32>
    %202 = arith.mulf %122, %201 : vector<2x128xf32>
    %203 = arith.addf %200, %202 : vector<2x128xf32>
    %204 = vector.broadcast %23 : f32 to vector<2x128xf32>
    %205 = arith.mulf %123, %204 : vector<2x128xf32>
    %206 = arith.addf %203, %205 : vector<2x128xf32>
    %207 = vector.broadcast %100 : f32 to vector<2x128xf32>
    %208 = arith.addf %206, %207 : vector<2x128xf32>
    %209 = vector.broadcast %24 : f32 to vector<2x128xf32>
    %210 = arith.mulf %177, %209 : vector<2x128xf32>
    %211 = vector.broadcast %25 : f32 to vector<2x128xf32>
    %212 = arith.mulf %179, %211 : vector<2x128xf32>
    %213 = arith.addf %210, %212 : vector<2x128xf32>
    %214 = vector.broadcast %26 : f32 to vector<2x128xf32>
    %215 = arith.mulf %181, %214 : vector<2x128xf32>
    %216 = arith.addf %213, %215 : vector<2x128xf32>
    %217 = vector.broadcast %27 : f32 to vector<2x128xf32>
    %218 = arith.mulf %183, %217 : vector<2x128xf32>
    %219 = arith.addf %216, %218 : vector<2x128xf32>
    %220 = vector.broadcast %28 : f32 to vector<2x128xf32>
    %221 = arith.mulf %120, %220 : vector<2x128xf32>
    %222 = arith.addf %219, %221 : vector<2x128xf32>
    %223 = vector.broadcast %29 : f32 to vector<2x128xf32>
    %224 = arith.mulf %121, %223 : vector<2x128xf32>
    %225 = arith.addf %222, %224 : vector<2x128xf32>
    %226 = vector.broadcast %30 : f32 to vector<2x128xf32>
    %227 = arith.mulf %122, %226 : vector<2x128xf32>
    %228 = arith.addf %225, %227 : vector<2x128xf32>
    %229 = vector.broadcast %31 : f32 to vector<2x128xf32>
    %230 = arith.mulf %123, %229 : vector<2x128xf32>
    %231 = arith.addf %228, %230 : vector<2x128xf32>
    %232 = vector.broadcast %101 : f32 to vector<2x128xf32>
    %233 = arith.addf %231, %232 : vector<2x128xf32>
    %234 = vector.broadcast %32 : f32 to vector<2x128xf32>
    %235 = arith.mulf %177, %234 : vector<2x128xf32>
    %236 = vector.broadcast %33 : f32 to vector<2x128xf32>
    %237 = arith.mulf %179, %236 : vector<2x128xf32>
    %238 = arith.addf %235, %237 : vector<2x128xf32>
    %239 = vector.broadcast %34 : f32 to vector<2x128xf32>
    %240 = arith.mulf %181, %239 : vector<2x128xf32>
    %241 = arith.addf %238, %240 : vector<2x128xf32>
    %242 = vector.broadcast %35 : f32 to vector<2x128xf32>
    %243 = arith.mulf %183, %242 : vector<2x128xf32>
    %244 = arith.addf %241, %243 : vector<2x128xf32>
    %245 = vector.broadcast %36 : f32 to vector<2x128xf32>
    %246 = arith.mulf %120, %245 : vector<2x128xf32>
    %247 = arith.addf %244, %246 : vector<2x128xf32>
    %248 = vector.broadcast %37 : f32 to vector<2x128xf32>
    %249 = arith.mulf %121, %248 : vector<2x128xf32>
    %250 = arith.addf %247, %249 : vector<2x128xf32>
    %251 = vector.broadcast %38 : f32 to vector<2x128xf32>
    %252 = arith.mulf %122, %251 : vector<2x128xf32>
    %253 = arith.addf %250, %252 : vector<2x128xf32>
    %254 = vector.broadcast %39 : f32 to vector<2x128xf32>
    %255 = arith.mulf %123, %254 : vector<2x128xf32>
    %256 = arith.addf %253, %255 : vector<2x128xf32>
    %257 = vector.broadcast %102 : f32 to vector<2x128xf32>
    %258 = arith.addf %256, %257 : vector<2x128xf32>
    %259 = vector.broadcast %40 : f32 to vector<2x128xf32>
    %260 = arith.mulf %177, %259 : vector<2x128xf32>
    %261 = vector.broadcast %41 : f32 to vector<2x128xf32>
    %262 = arith.mulf %179, %261 : vector<2x128xf32>
    %263 = arith.addf %260, %262 : vector<2x128xf32>
    %264 = vector.broadcast %42 : f32 to vector<2x128xf32>
    %265 = arith.mulf %181, %264 : vector<2x128xf32>
    %266 = arith.addf %263, %265 : vector<2x128xf32>
    %267 = vector.broadcast %43 : f32 to vector<2x128xf32>
    %268 = arith.mulf %183, %267 : vector<2x128xf32>
    %269 = arith.addf %266, %268 : vector<2x128xf32>
    %270 = vector.broadcast %44 : f32 to vector<2x128xf32>
    %271 = arith.mulf %120, %270 : vector<2x128xf32>
    %272 = arith.addf %269, %271 : vector<2x128xf32>
    %273 = vector.broadcast %45 : f32 to vector<2x128xf32>
    %274 = arith.mulf %121, %273 : vector<2x128xf32>
    %275 = arith.addf %272, %274 : vector<2x128xf32>
    %276 = vector.broadcast %46 : f32 to vector<2x128xf32>
    %277 = arith.mulf %122, %276 : vector<2x128xf32>
    %278 = arith.addf %275, %277 : vector<2x128xf32>
    %279 = vector.broadcast %47 : f32 to vector<2x128xf32>
    %280 = arith.mulf %123, %279 : vector<2x128xf32>
    %281 = arith.addf %278, %280 : vector<2x128xf32>
    %282 = vector.broadcast %103 : f32 to vector<2x128xf32>
    %283 = arith.addf %281, %282 : vector<2x128xf32>
    %cst_35 = arith.constant 0.000000e+00 : f32
    %284 = vector.broadcast %cst_35 : f32 to vector<2x128xf32>
    %285 = arith.maximumf %208, %284 : vector<2x128xf32>
    %cst_36 = arith.constant 0.000000e+00 : f32
    %286 = vector.broadcast %cst_36 : f32 to vector<2x128xf32>
    %287 = arith.maximumf %233, %286 : vector<2x128xf32>
    %cst_37 = arith.constant 0.000000e+00 : f32
    %288 = vector.broadcast %cst_37 : f32 to vector<2x128xf32>
    %289 = arith.maximumf %258, %288 : vector<2x128xf32>
    %cst_38 = arith.constant 0.000000e+00 : f32
    %290 = vector.broadcast %cst_38 : f32 to vector<2x128xf32>
    %291 = arith.maximumf %283, %290 : vector<2x128xf32>
    %292 = vector.broadcast %48 : f32 to vector<2x128xf32>
    %293 = arith.mulf %285, %292 : vector<2x128xf32>
    %294 = vector.broadcast %49 : f32 to vector<2x128xf32>
    %295 = arith.mulf %287, %294 : vector<2x128xf32>
    %296 = arith.addf %293, %295 : vector<2x128xf32>
    %297 = vector.broadcast %50 : f32 to vector<2x128xf32>
    %298 = arith.mulf %289, %297 : vector<2x128xf32>
    %299 = arith.addf %296, %298 : vector<2x128xf32>
    %300 = vector.broadcast %51 : f32 to vector<2x128xf32>
    %301 = arith.mulf %291, %300 : vector<2x128xf32>
    %302 = arith.addf %299, %301 : vector<2x128xf32>
    %303 = vector.broadcast %104 : f32 to vector<2x128xf32>
    %304 = arith.addf %302, %303 : vector<2x128xf32>
    %305 = vector.broadcast %52 : f32 to vector<2x128xf32>
    %306 = arith.mulf %285, %305 : vector<2x128xf32>
    %307 = vector.broadcast %53 : f32 to vector<2x128xf32>
    %308 = arith.mulf %287, %307 : vector<2x128xf32>
    %309 = arith.addf %306, %308 : vector<2x128xf32>
    %310 = vector.broadcast %54 : f32 to vector<2x128xf32>
    %311 = arith.mulf %289, %310 : vector<2x128xf32>
    %312 = arith.addf %309, %311 : vector<2x128xf32>
    %313 = vector.broadcast %55 : f32 to vector<2x128xf32>
    %314 = arith.mulf %291, %313 : vector<2x128xf32>
    %315 = arith.addf %312, %314 : vector<2x128xf32>
    %316 = vector.broadcast %105 : f32 to vector<2x128xf32>
    %317 = arith.addf %315, %316 : vector<2x128xf32>
    %318 = vector.broadcast %56 : f32 to vector<2x128xf32>
    %319 = arith.mulf %285, %318 : vector<2x128xf32>
    %320 = vector.broadcast %57 : f32 to vector<2x128xf32>
    %321 = arith.mulf %287, %320 : vector<2x128xf32>
    %322 = arith.addf %319, %321 : vector<2x128xf32>
    %323 = vector.broadcast %58 : f32 to vector<2x128xf32>
    %324 = arith.mulf %289, %323 : vector<2x128xf32>
    %325 = arith.addf %322, %324 : vector<2x128xf32>
    %326 = vector.broadcast %59 : f32 to vector<2x128xf32>
    %327 = arith.mulf %291, %326 : vector<2x128xf32>
    %328 = arith.addf %325, %327 : vector<2x128xf32>
    %329 = vector.broadcast %106 : f32 to vector<2x128xf32>
    %330 = arith.addf %328, %329 : vector<2x128xf32>
    %331 = vector.broadcast %60 : f32 to vector<2x128xf32>
    %332 = arith.mulf %285, %331 : vector<2x128xf32>
    %333 = vector.broadcast %61 : f32 to vector<2x128xf32>
    %334 = arith.mulf %287, %333 : vector<2x128xf32>
    %335 = arith.addf %332, %334 : vector<2x128xf32>
    %336 = vector.broadcast %62 : f32 to vector<2x128xf32>
    %337 = arith.mulf %289, %336 : vector<2x128xf32>
    %338 = arith.addf %335, %337 : vector<2x128xf32>
    %339 = vector.broadcast %63 : f32 to vector<2x128xf32>
    %340 = arith.mulf %291, %339 : vector<2x128xf32>
    %341 = arith.addf %338, %340 : vector<2x128xf32>
    %342 = vector.broadcast %107 : f32 to vector<2x128xf32>
    %343 = arith.addf %341, %342 : vector<2x128xf32>
    %cst_39 = arith.constant 0.000000e+00 : f32
    %344 = vector.broadcast %cst_39 : f32 to vector<2x128xf32>
    %345 = arith.maximumf %304, %344 : vector<2x128xf32>
    %cst_40 = arith.constant 0.000000e+00 : f32
    %346 = vector.broadcast %cst_40 : f32 to vector<2x128xf32>
    %347 = arith.maximumf %317, %346 : vector<2x128xf32>
    %cst_41 = arith.constant 0.000000e+00 : f32
    %348 = vector.broadcast %cst_41 : f32 to vector<2x128xf32>
    %349 = arith.maximumf %330, %348 : vector<2x128xf32>
    %cst_42 = arith.constant 0.000000e+00 : f32
    %350 = vector.broadcast %cst_42 : f32 to vector<2x128xf32>
    %351 = arith.maximumf %343, %350 : vector<2x128xf32>
    %352 = vector.broadcast %64 : f32 to vector<2x128xf32>
    %353 = arith.mulf %345, %352 : vector<2x128xf32>
    %354 = vector.broadcast %65 : f32 to vector<2x128xf32>
    %355 = arith.mulf %347, %354 : vector<2x128xf32>
    %356 = arith.addf %353, %355 : vector<2x128xf32>
    %357 = vector.broadcast %66 : f32 to vector<2x128xf32>
    %358 = arith.mulf %349, %357 : vector<2x128xf32>
    %359 = arith.addf %356, %358 : vector<2x128xf32>
    %360 = vector.broadcast %67 : f32 to vector<2x128xf32>
    %361 = arith.mulf %351, %360 : vector<2x128xf32>
    %362 = arith.addf %359, %361 : vector<2x128xf32>
    %363 = vector.broadcast %68 : f32 to vector<2x128xf32>
    %364 = arith.mulf %285, %363 : vector<2x128xf32>
    %365 = arith.addf %362, %364 : vector<2x128xf32>
    %366 = vector.broadcast %69 : f32 to vector<2x128xf32>
    %367 = arith.mulf %287, %366 : vector<2x128xf32>
    %368 = arith.addf %365, %367 : vector<2x128xf32>
    %369 = vector.broadcast %70 : f32 to vector<2x128xf32>
    %370 = arith.mulf %289, %369 : vector<2x128xf32>
    %371 = arith.addf %368, %370 : vector<2x128xf32>
    %372 = vector.broadcast %71 : f32 to vector<2x128xf32>
    %373 = arith.mulf %291, %372 : vector<2x128xf32>
    %374 = arith.addf %371, %373 : vector<2x128xf32>
    %375 = vector.broadcast %108 : f32 to vector<2x128xf32>
    %376 = arith.addf %374, %375 : vector<2x128xf32>
    %377 = vector.broadcast %72 : f32 to vector<2x128xf32>
    %378 = arith.mulf %345, %377 : vector<2x128xf32>
    %379 = vector.broadcast %73 : f32 to vector<2x128xf32>
    %380 = arith.mulf %347, %379 : vector<2x128xf32>
    %381 = arith.addf %378, %380 : vector<2x128xf32>
    %382 = vector.broadcast %74 : f32 to vector<2x128xf32>
    %383 = arith.mulf %349, %382 : vector<2x128xf32>
    %384 = arith.addf %381, %383 : vector<2x128xf32>
    %385 = vector.broadcast %75 : f32 to vector<2x128xf32>
    %386 = arith.mulf %351, %385 : vector<2x128xf32>
    %387 = arith.addf %384, %386 : vector<2x128xf32>
    %388 = vector.broadcast %76 : f32 to vector<2x128xf32>
    %389 = arith.mulf %285, %388 : vector<2x128xf32>
    %390 = arith.addf %387, %389 : vector<2x128xf32>
    %391 = vector.broadcast %77 : f32 to vector<2x128xf32>
    %392 = arith.mulf %287, %391 : vector<2x128xf32>
    %393 = arith.addf %390, %392 : vector<2x128xf32>
    %394 = vector.broadcast %78 : f32 to vector<2x128xf32>
    %395 = arith.mulf %289, %394 : vector<2x128xf32>
    %396 = arith.addf %393, %395 : vector<2x128xf32>
    %397 = vector.broadcast %79 : f32 to vector<2x128xf32>
    %398 = arith.mulf %291, %397 : vector<2x128xf32>
    %399 = arith.addf %396, %398 : vector<2x128xf32>
    %400 = vector.broadcast %109 : f32 to vector<2x128xf32>
    %401 = arith.addf %399, %400 : vector<2x128xf32>
    %402 = vector.broadcast %80 : f32 to vector<2x128xf32>
    %403 = arith.mulf %345, %402 : vector<2x128xf32>
    %404 = vector.broadcast %81 : f32 to vector<2x128xf32>
    %405 = arith.mulf %347, %404 : vector<2x128xf32>
    %406 = arith.addf %403, %405 : vector<2x128xf32>
    %407 = vector.broadcast %82 : f32 to vector<2x128xf32>
    %408 = arith.mulf %349, %407 : vector<2x128xf32>
    %409 = arith.addf %406, %408 : vector<2x128xf32>
    %410 = vector.broadcast %83 : f32 to vector<2x128xf32>
    %411 = arith.mulf %351, %410 : vector<2x128xf32>
    %412 = arith.addf %409, %411 : vector<2x128xf32>
    %413 = vector.broadcast %84 : f32 to vector<2x128xf32>
    %414 = arith.mulf %285, %413 : vector<2x128xf32>
    %415 = arith.addf %412, %414 : vector<2x128xf32>
    %416 = vector.broadcast %85 : f32 to vector<2x128xf32>
    %417 = arith.mulf %287, %416 : vector<2x128xf32>
    %418 = arith.addf %415, %417 : vector<2x128xf32>
    %419 = vector.broadcast %86 : f32 to vector<2x128xf32>
    %420 = arith.mulf %289, %419 : vector<2x128xf32>
    %421 = arith.addf %418, %420 : vector<2x128xf32>
    %422 = vector.broadcast %87 : f32 to vector<2x128xf32>
    %423 = arith.mulf %291, %422 : vector<2x128xf32>
    %424 = arith.addf %421, %423 : vector<2x128xf32>
    %425 = vector.broadcast %110 : f32 to vector<2x128xf32>
    %426 = arith.addf %424, %425 : vector<2x128xf32>
    %427 = vector.broadcast %88 : f32 to vector<2x128xf32>
    %428 = arith.mulf %345, %427 : vector<2x128xf32>
    %429 = vector.broadcast %89 : f32 to vector<2x128xf32>
    %430 = arith.mulf %347, %429 : vector<2x128xf32>
    %431 = arith.addf %428, %430 : vector<2x128xf32>
    %432 = vector.broadcast %90 : f32 to vector<2x128xf32>
    %433 = arith.mulf %349, %432 : vector<2x128xf32>
    %434 = arith.addf %431, %433 : vector<2x128xf32>
    %435 = vector.broadcast %91 : f32 to vector<2x128xf32>
    %436 = arith.mulf %351, %435 : vector<2x128xf32>
    %437 = arith.addf %434, %436 : vector<2x128xf32>
    %438 = vector.broadcast %92 : f32 to vector<2x128xf32>
    %439 = arith.mulf %285, %438 : vector<2x128xf32>
    %440 = arith.addf %437, %439 : vector<2x128xf32>
    %441 = vector.broadcast %93 : f32 to vector<2x128xf32>
    %442 = arith.mulf %287, %441 : vector<2x128xf32>
    %443 = arith.addf %440, %442 : vector<2x128xf32>
    %444 = vector.broadcast %94 : f32 to vector<2x128xf32>
    %445 = arith.mulf %289, %444 : vector<2x128xf32>
    %446 = arith.addf %443, %445 : vector<2x128xf32>
    %447 = vector.broadcast %95 : f32 to vector<2x128xf32>
    %448 = arith.mulf %291, %447 : vector<2x128xf32>
    %449 = arith.addf %446, %448 : vector<2x128xf32>
    %450 = vector.broadcast %111 : f32 to vector<2x128xf32>
    %451 = arith.addf %449, %450 : vector<2x128xf32>
    %cst_43 = arith.constant 5.000000e-01 : f32
    %452 = vector.broadcast %cst_43 : f32 to vector<2x128xf32>
    %453 = arith.mulf %452, %376 : vector<2x128xf32>
    %454 = math.tanh %453 : vector<2x128xf32>
    %cst_44 = arith.constant 5.000000e-01 : f32
    %455 = vector.broadcast %cst_44 : f32 to vector<2x128xf32>
    %456 = arith.mulf %455, %454 : vector<2x128xf32>
    %cst_45 = arith.constant 5.000000e-01 : f32
    %457 = vector.broadcast %cst_45 : f32 to vector<2x128xf32>
    %458 = arith.addf %456, %457 : vector<2x128xf32>
    %459 = arith.mulf %458, %113 : vector<2x128xf32>
    %c0_46 = arith.constant 0 : index
    %c0_47 = arith.constant 0 : index
    %c0_48 = arith.constant 0 : index
    %c0_49 = arith.constant 0 : index
    %460 = vector.load %arg5[%c0_46, %c0_47, %c0_48, %c0_49] : memref<1x4x2x128xf32, #tpu.memory_space<vmem>>, vector<1x1x2x128xf32>
    %461 = vector.shape_cast %460 : vector<1x1x2x128xf32> to vector<2x128xf32>
    %462 = vector.shape_cast %459 : vector<2x128xf32> to vector<1x1x2x128xf32>
    tpu.vector_store %arg5[%c0_46, %c0_47, %c0_48, %c0_49], %462 {strides = array<i32>} : memref<1x4x2x128xf32, #tpu.memory_space<vmem>>, vector<1x1x2x128xf32>,
    %cst_50 = arith.constant 5.000000e-01 : f32
    %463 = vector.broadcast %cst_50 : f32 to vector<2x128xf32>
    %464 = arith.mulf %463, %401 : vector<2x128xf32>
    %465 = math.tanh %464 : vector<2x128xf32>
    %cst_51 = arith.constant 5.000000e-01 : f32
    %466 = vector.broadcast %cst_51 : f32 to vector<2x128xf32>
    %467 = arith.mulf %466, %465 : vector<2x128xf32>
    %cst_52 = arith.constant 5.000000e-01 : f32
    %468 = vector.broadcast %cst_52 : f32 to vector<2x128xf32>
    %469 = arith.addf %467, %468 : vector<2x128xf32>
    %470 = arith.mulf %469, %115 : vector<2x128xf32>
    %c0_53 = arith.constant 0 : index
    %c1_54 = arith.constant 1 : index
    %c0_55 = arith.constant 0 : index
    %c0_56 = arith.constant 0 : index
    %471 = vector.load %arg5[%c0_53, %c1_54, %c0_55, %c0_56] : memref<1x4x2x128xf32, #tpu.memory_space<vmem>>, vector<1x1x2x128xf32>
    %472 = vector.shape_cast %471 : vector<1x1x2x128xf32> to vector<2x128xf32>
    %473 = vector.shape_cast %470 : vector<2x128xf32> to vector<1x1x2x128xf32>
    tpu.vector_store %arg5[%c0_53, %c1_54, %c0_55, %c0_56], %473 {strides = array<i32>} : memref<1x4x2x128xf32, #tpu.memory_space<vmem>>, vector<1x1x2x128xf32>,
    %cst_57 = arith.constant 5.000000e-01 : f32
    %474 = vector.broadcast %cst_57 : f32 to vector<2x128xf32>
    %475 = arith.mulf %474, %426 : vector<2x128xf32>
    %476 = math.tanh %475 : vector<2x128xf32>
    %cst_58 = arith.constant 5.000000e-01 : f32
    %477 = vector.broadcast %cst_58 : f32 to vector<2x128xf32>
    %478 = arith.mulf %477, %476 : vector<2x128xf32>
    %cst_59 = arith.constant 5.000000e-01 : f32
    %479 = vector.broadcast %cst_59 : f32 to vector<2x128xf32>
    %480 = arith.addf %478, %479 : vector<2x128xf32>
    %481 = arith.mulf %480, %117 : vector<2x128xf32>
    %c0_60 = arith.constant 0 : index
    %c2_61 = arith.constant 2 : index
    %c0_62 = arith.constant 0 : index
    %c0_63 = arith.constant 0 : index
    %482 = vector.load %arg5[%c0_60, %c2_61, %c0_62, %c0_63] : memref<1x4x2x128xf32, #tpu.memory_space<vmem>>, vector<1x1x2x128xf32>
    %483 = vector.shape_cast %482 : vector<1x1x2x128xf32> to vector<2x128xf32>
    %484 = vector.shape_cast %481 : vector<2x128xf32> to vector<1x1x2x128xf32>
    tpu.vector_store %arg5[%c0_60, %c2_61, %c0_62, %c0_63], %484 {strides = array<i32>} : memref<1x4x2x128xf32, #tpu.memory_space<vmem>>, vector<1x1x2x128xf32>,
    %cst_64 = arith.constant 5.000000e-01 : f32
    %485 = vector.broadcast %cst_64 : f32 to vector<2x128xf32>
    %486 = arith.mulf %485, %451 : vector<2x128xf32>
    %487 = math.tanh %486 : vector<2x128xf32>
    %cst_65 = arith.constant 5.000000e-01 : f32
    %488 = vector.broadcast %cst_65 : f32 to vector<2x128xf32>
    %489 = arith.mulf %488, %487 : vector<2x128xf32>
    %cst_66 = arith.constant 5.000000e-01 : f32
    %490 = vector.broadcast %cst_66 : f32 to vector<2x128xf32>
    %491 = arith.addf %489, %490 : vector<2x128xf32>
    %492 = arith.mulf %491, %119 : vector<2x128xf32>
    %c0_67 = arith.constant 0 : index
    %c3_68 = arith.constant 3 : index
    %c0_69 = arith.constant 0 : index
    %c0_70 = arith.constant 0 : index
    %493 = vector.load %arg5[%c0_67, %c3_68, %c0_69, %c0_70] : memref<1x4x2x128xf32, #tpu.memory_space<vmem>>, vector<1x1x2x128xf32>
    %494 = vector.shape_cast %493 : vector<1x1x2x128xf32> to vector<2x128xf32>
    %495 = vector.shape_cast %492 : vector<2x128xf32> to vector<1x1x2x128xf32>
    tpu.vector_store %arg5[%c0_67, %c3_68, %c0_69, %c0_70], %495 {strides = array<i32>} : memref<1x4x2x128xf32, #tpu.memory_space<vmem>>, vector<1x1x2x128xf32>,
    return
  }
  func.func @transform_0(%arg0: i32, %arg1: i32) -> (i32, i32, i32, i32) {
    %c0_i32 = arith.constant 0 : i32
    %c0_i32_0 = arith.constant 0 : i32
    %c0_i32_1 = arith.constant 0 : i32
    return %arg0, %c0_i32, %arg1, %c0_i32_0 : i32, i32, i32, i32
  }
  func.func @transform_1(%arg0: i32, %arg1: i32) -> i32 {
    %c0_i32 = arith.constant 0 : i32
    %c0_i32_0 = arith.constant 0 : i32
    return %c0_i32 : i32
  }
  func.func @transform_2(%arg0: i32, %arg1: i32) -> i32 {
    %c0_i32 = arith.constant 0 : i32
    %c0_i32_0 = arith.constant 0 : i32
    return %c0_i32 : i32
  }
  func.func @transform_3(%arg0: i32, %arg1: i32) -> (i32, i32, i32, i32) {
    %c0_i32 = arith.constant 0 : i32
    %c0_i32_0 = arith.constant 0 : i32
    %c0_i32_1 = arith.constant 0 : i32
    return %arg0, %c0_i32, %arg1, %c0_i32_0 : i32, i32, i32, i32
  }
}

</mosaic_0001>

<llo_original>
// kernel: tpu_custom_call.1
$region0: #{tpu_custom_call.1}
  #allocation0 [shape = 'u32[]', space=smem, size = 0x4, offset = 0x4, fixed_abs, tag = 'smem constant byte address 0x4 - core index']
  #allocation1 [shape = 'u32[144,128]{1,0:T(1,128)}', space=vmem, size = 0x12000, scoped, tag = 'internal scratch']
  %s0 = inlined_call_operand.hbm [shape: f32[2,4,2,128], index: 0, kind: input, shape index: {}]
  %s1 = inlined_call_operand.vmem [shape: f32[96], index: 1, kind: input, shape index: {}]
  %s2 = inlined_call_operand.vmem [shape: f32[16], index: 2, kind: input, shape index: {}]
  %s3 = inlined_call_operand.hbm [shape: f32[2,4,2,128], index: 3, kind: output, shape index: {}]
  %s4 = sld [smem:[#allocation0]]
  $region57: #{tpu_custom_call.1} parent=0
    _
  %s6 = ssub.s32 1, %s4
  %s7 = scalar_select 0, %s6, %s4
  $region1: #{tpu_custom_call.1} parent=0
    #allocation2 [shape = 'u8[8192]{0}', space=vmem, size = 0x2000, scoped, tag = 'input window, operand 0']
    #allocation3 [shape = 's32[2]{0}', space=sflag, size = 0x8, scoped, tag = 'scoped memory for tpu_custom_call.1']
    #allocation4 [shape = 's32[2]{0}', space=sflag, size = 0x8, scoped, tag = 'scoped memory for tpu_custom_call.1']
    #allocation5 [shape = 's32[2]{0}', space=sflag, size = 0x8, scoped, tag = 'scoped memory for tpu_custom_call.1']
    #allocation6 [shape = 'u8[512]{0}', space=smem, size = 0x200, scoped, tag = 'input window, operand 1, single buffered']
    #allocation7 [shape = 'u8[512]{0}', space=smem, size = 0x200, scoped, tag = 'input window, operand 2, single buffered']
    #allocation8 [shape = 's32[1]{0}', space=sflag, size = 0x4, scoped, tag = 'scoped memory for tpu_custom_call.1']
    #allocation9 [shape = 'u8[8192]{0}', space=vmem, size = 0x2000, scoped, tag = 'output window, operand 0']
    %8 = vsyncpa [#allocation3], 0
    %s9 = scalar_lea.sflag [#allocation3], 1
    %10 = vsyncpa %s9, 0
    %11 = vsyncpa [#allocation5], 0
    %12 = vsyncpa [#allocation8], 0
    %13 = vsyncpa [#allocation4], 0
    %s14 = scalar_lea.sflag [#allocation4], 1
    %15 = vsyncpa %s14, 0
    loop: start=0, step=1, limit=4
    $region2: #{tpu_custom_call.1} parent=1 // loop_pre_header
      _
    $region3: #{tpu_custom_call.1} parent=1 // loop_header
      %s17 = sphi 0, %s21
      %p18 = scmp.ge.s32.totalorder %s17, 4
      %s24 = sphi 0, %s36
      %s25 = sphi 0, %s32
      %s26 = sphi 0, %s24
      %s27 = sphi 0, %s25
      %s28 = sphi 0, %s26
      %s29 = sphi 0, %s27
      %s41 = sphi 0, %s43
      %s44 = sphi 0, %s41
      %s45 = sphi 0, %s44
      %s61 = sphi 0, %s45
      %s65 = sphi 0, %s65
      %s67 = sphi 0, %s65
      %s68 = sphi 0, %s67
      %s82 = sphi 0, %s68
      %s86 = sphi 0, %s86
      %s88 = sphi 0, %s86
      %s89 = sphi 0, %s88
      %s103 = sphi 0, %s89
      %s111 = sphi 0, %s113
      %s114 = sphi 0, %s111
      %s115 = sphi 0, %s114
      %s131 = sphi 0, %s115
    $region4: #{tpu_custom_call.1} parent=1 // loop_header_branch
      %20 = sbr.rel (%p18) target = $region8
    $region5: #{tpu_custom_call.1} parent=1 // loop_body
      %s22 = ssub.s32 %s17, 1
      %s23 = ssub.s32 %s17, 2
      %s30 = sadd.s32 1, %s25
      %p31 = scmp.ge.s32.totalorder %s30, 1
      %s32 = scalar_select %p31, 0, %s30
      %s33 = sadd.s32 1, %s24
      %s34 = scalar_select %p31, %s33, %s24
      %p35 = scmp.ge.s32.totalorder %s34, 2
      %s36 = scalar_select %p35, 0, %s34
      %s37 = ssub.s32 %s24, %s36
      %s38 = ssub.s32 %s25, %s32
      %s39 = sor.u32 %s37, %s38
      %p40 = scmp.eq.s32.totalorder %s39, 0
      %s42 = sadd.s32 %s41, 1
      %s43 = scalar_select %p40, %s41, %s42
      %p46 = pneg %p40
      %p47 = scmp.eq.s32.totalorder %s17, 1
      %p48 = por %p46, %p47
      %p49 = scmp.ne.s32.totalorder %s41, %s44
      %p50 = scmp.eq.s32.totalorder %s17, 0
      %p51 = por %p49, %p50
      %p52 = scmp.ne.s32.totalorder %s41, %s44
      %p53 = scmp.eq.s32.totalorder %s22, 1
      %p54 = por %p52, %p53
      %p55 = scmp.ne.s32.totalorder %s44, %s45
      %p56 = scmp.eq.s32.totalorder %s22, 0
      %p57 = por %p55, %p56
      %p58 = scmp.ne.s32.totalorder %s44, %s45
      %p59 = scmp.eq.s32.totalorder %s23, 1
      %p60 = por %p58, %p59
      %p62 = scmp.ne.s32.totalorder %s45, %s61
      %p63 = scmp.eq.s32.totalorder %s23, 0
      %p64 = por %p62, %p63
      %s66 = sadd.s32 %s65, 1
      %p69 = scmp.eq.s32.totalorder %s17, 1
      %p70 = scmp.ne.s32.totalorder %s65, %s67
      %p71 = scmp.eq.s32.totalorder %s17, 0
      %p72 = por %p70, %p71
      %p73 = scmp.ne.s32.totalorder %s65, %s67
      %p74 = scmp.eq.s32.totalorder %s22, 1
      %p75 = por %p73, %p74
      %p76 = scmp.ne.s32.totalorder %s67, %s68
      %p77 = scmp.eq.s32.totalorder %s22, 0
      %p78 = por %p76, %p77
      %p79 = scmp.ne.s32.totalorder %s67, %s68
      %p80 = scmp.eq.s32.totalorder %s23, 1
      %p81 = por %p79, %p80
      %p83 = scmp.ne.s32.totalorder %s68, %s82
      %p84 = scmp.eq.s32.totalorder %s23, 0
      %p85 = por %p83, %p84
      %s87 = sadd.s32 %s86, 1
      %p90 = scmp.eq.s32.totalorder %s17, 1
      %p91 = scmp.ne.s32.totalorder %s86, %s88
      %p92 = scmp.eq.s32.totalorder %s17, 0
      %p93 = por %p91, %p92
      %p94 = scmp.ne.s32.totalorder %s86, %s88
      %p95 = scmp.eq.s32.totalorder %s22, 1
      %p96 = por %p94, %p95
      %p97 = scmp.ne.s32.totalorder %s88, %s89
      %p98 = scmp.eq.s32.totalorder %s22, 0
      %p99 = por %p97, %p98
      %p100 = scmp.ne.s32.totalorder %s88, %s89
      %p101 = scmp.eq.s32.totalorder %s23, 1
      %p102 = por %p100, %p101
      %p104 = scmp.ne.s32.totalorder %s89, %s103
      %p105 = scmp.eq.s32.totalorder %s23, 0
      %p106 = por %p104, %p105
      %s107 = ssub.s32 %s24, %s36
      %s108 = ssub.s32 %s25, %s32
      %s109 = sor.u32 %s107, %s108
      %p110 = scmp.eq.s32.totalorder %s109, 0
      %s112 = sadd.s32 %s111, 1
      %s113 = scalar_select %p110, %s111, %s112
      %p116 = pneg %p110
      %p117 = scmp.eq.s32.totalorder %s17, 1
      %p118 = por %p116, %p117
      %p119 = scmp.ne.s32.totalorder %s111, %s114
      %p120 = scmp.eq.s32.totalorder %s17, 0
      %p121 = por %p119, %p120
      %p122 = scmp.ne.s32.totalorder %s111, %s114
      %p123 = scmp.eq.s32.totalorder %s22, 1
      %p124 = por %p122, %p123
      %p125 = scmp.ne.s32.totalorder %s114, %s115
      %p126 = scmp.eq.s32.totalorder %s22, 0
      %p127 = por %p125, %p126
      %p128 = scmp.ne.s32.totalorder %s114, %s115
      %p129 = scmp.eq.s32.totalorder %s23, 1
      %p130 = por %p128, %p129
      %p132 = scmp.ne.s32.totalorder %s115, %s131
      %p133 = scmp.eq.s32.totalorder %s23, 0
      %p134 = por %p132, %p133
      %p135 = scmp.le.s32.totalorder 1, %s17
      %p136 = scmp.lt.s32.totalorder %s17, 3
      %p137 = pnand %p135, %p136
      %p138 = pneg %p137
      // Predicated region
      $region9: #{tpu_custom_call.1} parent=5 // pred_check
        _
      $region10: #{tpu_custom_call.1} parent=5 // pred_check_branch
        %140 = sbr.rel (%p137) target = $region12
      $region11: #{tpu_custom_call.1} parent=5 // pred_region
        %s141 = ssub.s32 %s17, 1
        // Predicated region
        $region13: #{tpu_custom_call.1} parent=11 // pred_check
          %p142 = pneg %p78
        $region14: #{tpu_custom_call.1} parent=11 // pred_check_branch
          %144 = sbr.rel (%p142) target = $region16
        $region15: #{tpu_custom_call.1} parent=11 // pred_region
          %s146 = ssub.s32 16, 16
          %147 = vsyncadd [#allocation5], %s146
          %s149 = sshll.u32 %s1, 4
          %s150 = int_to_ptr.vmem [resolvable:$true] %s149
          %152 = dma.vmem_to_smem %s150, 16, [#allocation6], [#allocation5]
        $region16: #{tpu_custom_call.1} parent=11 // pred_fallthru
          _
        // Predicated region
        $region17: #{tpu_custom_call.1} parent=11 // pred_check
          %p153 = pneg %p99
        $region18: #{tpu_custom_call.1} parent=11 // pred_check_branch
          %155 = sbr.rel (%p153) target = $region20
        $region19: #{tpu_custom_call.1} parent=11 // pred_region
          %s157 = ssub.s32 16, 16
          %158 = vsyncadd [#allocation8], %s157
          %s160 = sshll.u32 %s2, 4
          %s161 = int_to_ptr.vmem [resolvable:$true] %s160
          %163 = dma.vmem_to_smem %s161, 16, [#allocation7], [#allocation8]
        $region20: #{tpu_custom_call.1} parent=11 // pred_fallthru
          _
      $region12: #{tpu_custom_call.1} parent=5 // pred_fallthru
        _
      %p164 = scmp.lt.s32.totalorder %s17, 2
      // Predicated region
      $region21: #{tpu_custom_call.1} parent=5 // pred_check
        %p165 = pneg %p164
      $region22: #{tpu_custom_call.1} parent=5 // pred_check_branch
        %167 = sbr.rel (%p165) target = $region24
      $region23: #{tpu_custom_call.1} parent=5 // pred_region
        // Predicated region
        $region25: #{tpu_custom_call.1} parent=23 // pred_check
          %p168 = pneg %p51
        $region26: #{tpu_custom_call.1} parent=23 // pred_check_branch
          %170 = sbr.rel (%p168) target = $region28
        $region27: #{tpu_custom_call.1} parent=23 // pred_region
          %s171 = sand.u32 %s41, 1
          %s172 = scalar_lea.sflag [#allocation3], %s171
          %s173 = sand.u32 %s41, 1
          %s174 = smul.addr %s173, 8
          %s175 = scalar_lea.vmem [#allocation2], %s174
          %s177 = ssub.s32 128, 128
          %178 = vsyncadd %s172, %s177
          %s179 = smul.addr %s24, 4
          %s180 = sadd.s32 %s25, %s179
          %s181 = smul.addr %s180, 32
          %s182 = scalar_lea.hbm %s0, %s181
          %s183 = sshll.u32 %s175, 4
          %s184 = int_to_ptr.vmem [resolvable:$true] %s183
          %189 = dma.hbm_to_vmem [thread:$0]  %s182, 128, %s184, %s172, 32, 32, 2
        $region28: #{tpu_custom_call.1} parent=23 // pred_fallthru
          _
      $region24: #{tpu_custom_call.1} parent=5 // pred_fallthru
        _
      %p190 = scmp.le.s32.totalorder 1, %s17
      %p191 = scmp.lt.s32.totalorder %s17, 3
      %p192 = pnand %p190, %p191
      %p193 = pneg %p192
      // Predicated region
      $region29: #{tpu_custom_call.1} parent=5 // pred_check
        _
      $region30: #{tpu_custom_call.1} parent=5 // pred_check_branch
        %195 = sbr.rel (%p192) target = $region32
      $region31: #{tpu_custom_call.1} parent=5 // pred_region
        %s196 = ssub.s32 %s17, 1
        %s197 = sand.u32 %s44, 1
        %s198 = scalar_lea.sflag [#allocation3], %s197
        %s199 = sand.u32 %s44, 1
        %s200 = smul.addr %s199, 8
        %s201 = scalar_lea.vmem [#allocation2], %s200
        // Predicated region
        $region33: #{tpu_custom_call.1} parent=31 // pred_check
          %p202 = pneg %p57
        $region34: #{tpu_custom_call.1} parent=31 // pred_check_branch
          %204 = sbr.rel (%p202) target = $region36
        $region35: #{tpu_custom_call.1} parent=31 // pred_region
          %205 = dma.done %s198, 128
        $region36: #{tpu_custom_call.1} parent=31 // pred_fallthru
          _
        // Predicated region
        $region37: #{tpu_custom_call.1} parent=31 // pred_check
          %p206 = pneg %p78
        $region38: #{tpu_custom_call.1} parent=31 // pred_check_branch
          %208 = sbr.rel (%p206) target = $region40
        $region39: #{tpu_custom_call.1} parent=31 // pred_region
          %209 = dma.done [#allocation5], 16
        $region40: #{tpu_custom_call.1} parent=31 // pred_fallthru
          _
        // Predicated region
        $region41: #{tpu_custom_call.1} parent=31 // pred_check
          %p210 = pneg %p99
        $region42: #{tpu_custom_call.1} parent=31 // pred_check_branch
          %212 = sbr.rel (%p210) target = $region44
        $region43: #{tpu_custom_call.1} parent=31 // pred_region
          %213 = dma.done [#allocation8], 16
        $region44: #{tpu_custom_call.1} parent=31 // pred_fallthru
          _
        %214 = sfence
        %s215 = sand.u32 %s44, 1
        %s216 = scalar_lea.sflag [#allocation3], %s215
        %s217 = sand.u32 %s44, 1
        %s218 = smul.addr %s217, 8
        %s219 = scalar_lea.vmem [#allocation2], %s218
        %p220 = pneg %p57
        %p221 = pneg %p54
        %p222 = pneg %p78
        %p223 = pneg %p75
        %p224 = pneg %p99
        %p225 = pneg %p96
        %p226 = pneg %p127
        %p227 = pneg %p124
        %s228 = sand.u32 %s114, 1
        %s229 = scalar_lea.sflag [#allocation4], %s228
        %s230 = sand.u32 %s114, 1
        %s231 = smul.addr %s230, 8
        %s232 = scalar_lea.vmem [#allocation9], %s231
        %s233 = sld [smem:[#allocation6]]
        %s234 = sld [smem:[#allocation6 + $0x1]]
        %s235 = sld [smem:[#allocation6 + $0x2]]
        %s236 = sld [smem:[#allocation6 + $0x3]]
        %s237 = sld [smem:[#allocation6 + $0x4]]
        %s238 = sld [smem:[#allocation6 + $0x5]]
        %s239 = sld [smem:[#allocation6 + $0x6]]
        %s240 = sld [smem:[#allocation6 + $0x7]]
        %s241 = sld [smem:[#allocation6 + $0x8]]
        %s242 = sld [smem:[#allocation6 + $0x9]]
        %s243 = sld [smem:[#allocation6 + $0xa]]
        %s244 = sld [smem:[#allocation6 + $0xb]]
        %s245 = sld [smem:[#allocation6 + $0xc]]
        %s246 = sld [smem:[#allocation6 + $0xd]]
        %s247 = sld [smem:[#allocation6 + $0xe]]
        %s248 = sld [smem:[#allocation6 + $0xf]]
        %s249 = sld [smem:[#allocation6 + $0x10]]
        %s250 = sld [smem:[#allocation6 + $0x11]]
        %s251 = sld [smem:[#allocation6 + $0x12]]
        %s252 = sld [smem:[#allocation6 + $0x13]]
        %s253 = sld [smem:[#allocation6 + $0x14]]
        %s254 = sld [smem:[#allocation6 + $0x15]]
        %s255 = sld [smem:[#allocation6 + $0x16]]
        %s256 = sld [smem:[#allocation6 + $0x17]]
        %s257 = sld [smem:[#allocation6 + $0x18]]
        %s258 = sld [smem:[#allocation6 + $0x19]]
        %s259 = sld [smem:[#allocation6 + $0x1a]]
        %s260 = sld [smem:[#allocation6 + $0x1b]]
        %s261 = sld [smem:[#allocation6 + $0x1c]]
        %s262 = sld [smem:[#allocation6 + $0x1d]]
        %s263 = sld [smem:[#allocation6 + $0x1e]]
        %s264 = sld [smem:[#allocation6 + $0x1f]]
        %s265 = sld [smem:[#allocation6 + $0x20]]
        %s266 = sld [smem:[#allocation6 + $0x21]]
        %s267 = sld [smem:[#allocation6 + $0x22]]
        %s268 = sld [smem:[#allocation6 + $0x23]]
        %s269 = sld [smem:[#allocation6 + $0x24]]
        %s270 = sld [smem:[#allocation6 + $0x25]]
        %s271 = sld [smem:[#allocation6 + $0x26]]
        %s272 = sld [smem:[#allocation6 + $0x27]]
        %s273 = sld [smem:[#allocation6 + $0x28]]
        %s274 = sld [smem:[#allocation6 + $0x29]]
        %s275 = sld [smem:[#allocation6 + $0x2a]]
        %s276 = sld [smem:[#allocation6 + $0x2b]]
        %s277 = sld [smem:[#allocation6 + $0x2c]]
        %s278 = sld [smem:[#allocation6 + $0x2d]]
        %s279 = sld [smem:[#allocation6 + $0x2e]]
        %s280 = sld [smem:[#allocation6 + $0x2f]]
        %s281 = sld [smem:[#allocation6 + $0x30]]
        %s282 = sld [smem:[#allocation6 + $0x31]]
        %s283 = sld [smem:[#allocation6 + $0x32]]
        %s284 = sld [smem:[#allocation6 + $0x33]]
        %s285 = sld [smem:[#allocation6 + $0x34]]
        %s286 = sld [smem:[#allocation6 + $0x35]]
        %s287 = sld [smem:[#allocation6 + $0x36]]
        %s288 = sld [smem:[#allocation6 + $0x37]]
        %s289 = sld [smem:[#allocation6 + $0x38]]
        %s290 = sld [smem:[#allocation6 + $0x39]]
        %s291 = sld [smem:[#allocation6 + $0x3a]]
        %s292 = sld [smem:[#allocation6 + $0x3b]]
        %s293 = sld [smem:[#allocation6 + $0x3c]]
        %s294 = sld [smem:[#allocation6 + $0x3d]]
        %s295 = sld [smem:[#allocation6 + $0x3e]]
        %s296 = sld [smem:[#allocation6 + $0x3f]]
        %s297 = sld [smem:[#allocation6 + $0x40]]
        %s298 = sld [smem:[#allocation6 + $0x41]]
        %s299 = sld [smem:[#allocation6 + $0x42]]
        %s300 = sld [smem:[#allocation6 + $0x43]]
        %s301 = sld [smem:[#allocation6 + $0x44]]
        %s302 = sld [smem:[#allocation6 + $0x45]]
        %s303 = sld [smem:[#allocation6 + $0x46]]
        %s304 = sld [smem:[#allocation6 + $0x47]]
        %s305 = sld [smem:[#allocation6 + $0x48]]
        %s306 = sld [smem:[#allocation6 + $0x49]]
        %s307 = sld [smem:[#allocation6 + $0x4a]]
        %s308 = sld [smem:[#allocation6 + $0x4b]]
        %s309 = sld [smem:[#allocation6 + $0x4c]]
        %s310 = sld [smem:[#allocation6 + $0x4d]]
        %s311 = sld [smem:[#allocation6 + $0x4e]]
        %s312 = sld [smem:[#allocation6 + $0x4f]]
        %s313 = sld [smem:[#allocation6 + $0x50]]
        %s314 = sld [smem:[#allocation6 + $0x51]]
        %s315 = sld [smem:[#allocation6 + $0x52]]
        %s316 = sld [smem:[#allocation6 + $0x53]]
        %s317 = sld [smem:[#allocation6 + $0x54]]
        %s318 = sld [smem:[#allocation6 + $0x55]]
        %s319 = sld [smem:[#allocation6 + $0x56]]
        %s320 = sld [smem:[#allocation6 + $0x57]]
        %s321 = sld [smem:[#allocation6 + $0x58]]
        %s322 = sld [smem:[#allocation6 + $0x59]]
        %s323 = sld [smem:[#allocation6 + $0x5a]]
        %s324 = sld [smem:[#allocation6 + $0x5b]]
        %s325 = sld [smem:[#allocation6 + $0x5c]]
        %s326 = sld [smem:[#allocation6 + $0x5d]]
        %s327 = sld [smem:[#allocation6 + $0x5e]]
        %s328 = sld [smem:[#allocation6 + $0x5f]]
        %s329 = sld [smem:[#allocation7]]
        %s330 = sld [smem:[#allocation7 + $0x1]]
        %s331 = sld [smem:[#allocation7 + $0x2]]
        %s332 = sld [smem:[#allocation7 + $0x3]]
        %s333 = sld [smem:[#allocation7 + $0x4]]
        %s334 = sld [smem:[#allocation7 + $0x5]]
        %s335 = sld [smem:[#allocation7 + $0x6]]
        %s336 = sld [smem:[#allocation7 + $0x7]]
        %s337 = sld [smem:[#allocation7 + $0x8]]
        %s338 = sld [smem:[#allocation7 + $0x9]]
        %s339 = sld [smem:[#allocation7 + $0xa]]
        %s340 = sld [smem:[#allocation7 + $0xb]]
        %s341 = sld [smem:[#allocation7 + $0xc]]
        %s342 = sld [smem:[#allocation7 + $0xd]]
        %s343 = sld [smem:[#allocation7 + $0xe]]
        %s344 = sld [smem:[#allocation7 + $0xf]]
        %v345 = vld [vmem:[%s201] sm:$0x3]
        %s346 = scalar_lea.vmem %s201, 2 [#allocation2]
        %v347 = vld [vmem:[%s346] sm:$0x3]
        %s348 = scalar_lea.vmem %s201, 4 [#allocation2]
        %v349 = vld [vmem:[%s348] sm:$0x3]
        %s350 = scalar_lea.vmem %s201, 6 [#allocation2]
        %v351 = vld [vmem:[%s350] sm:$0x3]
        %v352 = vand.u32 2147483647, %v345
        %v353 = vand.u32 2147483647, %v347
        %v354 = vand.u32 2147483647, %v349
        %v355 = vand.u32 2147483647, %v351
        %v356 = vstv %s233
        %v357 = vmul.f32 %v352, %v356
        %v358 = vstv %s234
        %v359 = vmul.f32 %v353, %v358
        %v360 = vadd.f32 %v357, %v359
        %v361 = vstv %s235
        %v362 = vmul.f32 %v354, %v361
        %v363 = vadd.f32 %v360, %v362
        %v364 = vstv %s236
        %v365 = vmul.f32 %v355, %v364
        %v366 = vadd.f32 %v363, %v365
        %v367 = vstv %s329
        %v368 = vadd.f32 %v366, %v367
        %v369 = vstv %s237
        %v370 = vmul.f32 %v352, %v369
        %v371 = vstv %s238
        %v372 = vmul.f32 %v353, %v371
        %v373 = vadd.f32 %v370, %v372
        %v374 = vstv %s239
        %v375 = vmul.f32 %v354, %v374
        %v376 = vadd.f32 %v373, %v375
        %v377 = vstv %s240
        %v378 = vmul.f32 %v355, %v377
        %v379 = vadd.f32 %v376, %v378
        %v380 = vstv %s330
        %v381 = vadd.f32 %v379, %v380
        %v382 = vstv %s241
        %v383 = vmul.f32 %v352, %v382
        %v384 = vstv %s242
        %v385 = vmul.f32 %v353, %v384
        %v386 = vadd.f32 %v383, %v385
        %v387 = vstv %s243
        %v388 = vmul.f32 %v354, %v387
        %v389 = vadd.f32 %v386, %v388
        %v390 = vstv %s244
        %v391 = vmul.f32 %v355, %v390
        %v392 = vadd.f32 %v389, %v391
        %v393 = vstv %s331
        %v394 = vadd.f32 %v392, %v393
        %v395 = vstv %s245
        %v396 = vmul.f32 %v352, %v395
        %v397 = vstv %s246
        %v398 = vmul.f32 %v353, %v397
        %v399 = vadd.f32 %v396, %v398
        %v400 = vstv %s247
        %v401 = vmul.f32 %v354, %v400
        %v402 = vadd.f32 %v399, %v401
        %v403 = vstv %s248
        %v404 = vmul.f32 %v355, %v403
        %v405 = vadd.f32 %v402, %v404
        %v406 = vstv %s332
        %v407 = vadd.f32 %v405, %v406
        %v408 = vmax.f32 %v368, 0.0
        %v409 = vmax.f32 %v381, 0.0
        %v410 = vmax.f32 %v394, 0.0
        %v411 = vmax.f32 %v407, 0.0
        %v412 = vstv %s249
        %v413 = vmul.f32 %v408, %v412
        %v414 = vstv %s250
        %v415 = vmul.f32 %v409, %v414
        %v416 = vadd.f32 %v413, %v415
        %v417 = vstv %s251
        %v418 = vmul.f32 %v410, %v417
        %v419 = vadd.f32 %v416, %v418
        %v420 = vstv %s252
        %v421 = vmul.f32 %v411, %v420
        %v422 = vadd.f32 %v419, %v421
        %v423 = vstv %s253
        %v424 = vmul.f32 %v352, %v423
        %v425 = vadd.f32 %v422, %v424
        %v426 = vstv %s254
        %v427 = vmul.f32 %v353, %v426
        %v428 = vadd.f32 %v425, %v427
        %v429 = vstv %s255
        %v430 = vmul.f32 %v354, %v429
        %v431 = vadd.f32 %v428, %v430
        %v432 = vstv %s256
        %v433 = vmul.f32 %v355, %v432
        %v434 = vadd.f32 %v431, %v433
        %v435 = vstv %s333
        %v436 = vadd.f32 %v434, %v435
        %v437 = vstv %s257
        %v438 = vmul.f32 %v408, %v437
        %v439 = vstv %s258
        %v440 = vmul.f32 %v409, %v439
        %v441 = vadd.f32 %v438, %v440
        %v442 = vstv %s259
        %v443 = vmul.f32 %v410, %v442
        %v444 = vadd.f32 %v441, %v443
        %v445 = vstv %s260
        %v446 = vmul.f32 %v411, %v445
        %v447 = vadd.f32 %v444, %v446
        %v448 = vstv %s261
        %v449 = vmul.f32 %v352, %v448
        %v450 = vadd.f32 %v447, %v449
        %v451 = vstv %s262
        %v452 = vmul.f32 %v353, %v451
        %v453 = vadd.f32 %v450, %v452
        %v454 = vstv %s263
        %v455 = vmul.f32 %v354, %v454
        %v456 = vadd.f32 %v453, %v455
        %v457 = vstv %s264
        %v458 = vmul.f32 %v355, %v457
        %v459 = vadd.f32 %v456, %v458
        %v460 = vstv %s334
        %v461 = vadd.f32 %v459, %v460
        %v462 = vstv %s265
        %v463 = vmul.f32 %v408, %v462
        %v464 = vstv %s266
        %v465 = vmul.f32 %v409, %v464
        %v466 = vadd.f32 %v463, %v465
        %v467 = vstv %s267
        %v468 = vmul.f32 %v410, %v467
        %v469 = vadd.f32 %v466, %v468
        %v470 = vstv %s268
        %v471 = vmul.f32 %v411, %v470
        %v472 = vadd.f32 %v469, %v471
        %v473 = vstv %s269
        %v474 = vmul.f32 %v352, %v473
        %v475 = vadd.f32 %v472, %v474
        %v476 = vstv %s270
        %v477 = vmul.f32 %v353, %v476
        %v478 = vadd.f32 %v475, %v477
        %v479 = vstv %s271
        %v480 = vmul.f32 %v354, %v479
        %v481 = vadd.f32 %v478, %v480
        %v482 = vstv %s272
        %v483 = vmul.f32 %v355, %v482
        %v484 = vadd.f32 %v481, %v483
        %v485 = vstv %s335
        %v486 = vadd.f32 %v484, %v485
        %v487 = vstv %s273
        %v488 = vmul.f32 %v408, %v487
        %v489 = vstv %s274
        %v490 = vmul.f32 %v409, %v489
        %v491 = vadd.f32 %v488, %v490
        %v492 = vstv %s275
        %v493 = vmul.f32 %v410, %v492
        %v494 = vadd.f32 %v491, %v493
        %v495 = vstv %s276
        %v496 = vmul.f32 %v411, %v495
        %v497 = vadd.f32 %v494, %v496
        %v498 = vstv %s277
        %v499 = vmul.f32 %v352, %v498
        %v500 = vadd.f32 %v497, %v499
        %v501 = vstv %s278
        %v502 = vmul.f32 %v353, %v501
        %v503 = vadd.f32 %v500, %v502
        %v504 = vstv %s279
        %v505 = vmul.f32 %v354, %v504
        %v506 = vadd.f32 %v503, %v505
        %v507 = vstv %s280
        %v508 = vmul.f32 %v355, %v507
        %v509 = vadd.f32 %v506, %v508
        %v510 = vstv %s336
        %v511 = vadd.f32 %v509, %v510
        %v512 = vmax.f32 %v436, 0.0
        %v513 = vmax.f32 %v461, 0.0
        %v514 = vmax.f32 %v486, 0.0
        %v515 = vmax.f32 %v511, 0.0
        %v516 = vstv %s281
        %v517 = vmul.f32 %v512, %v516
        %v518 = vstv %s282
        %v519 = vmul.f32 %v513, %v518
        %v520 = vadd.f32 %v517, %v519
        %v521 = vstv %s283
        %v522 = vmul.f32 %v514, %v521
        %v523 = vadd.f32 %v520, %v522
        %v524 = vstv %s284
        %v525 = vmul.f32 %v515, %v524
        %v526 = vadd.f32 %v523, %v525
        %v527 = vstv %s337
        %v528 = vadd.f32 %v526, %v527
        %v529 = vstv %s285
        %v530 = vmul.f32 %v512, %v529
        %v531 = vstv %s286
        %v532 = vmul.f32 %v513, %v531
        %v533 = vadd.f32 %v530, %v532
        %v534 = vstv %s287
        %v535 = vmul.f32 %v514, %v534
        %v536 = vadd.f32 %v533, %v535
        %v537 = vstv %s288
        %v538 = vmul.f32 %v515, %v537
        %v539 = vadd.f32 %v536, %v538
        %v540 = vstv %s338
        %v541 = vadd.f32 %v539, %v540
        %v542 = vstv %s289
        %v543 = vmul.f32 %v512, %v542
        %v544 = vstv %s290
        %v545 = vmul.f32 %v513, %v544
        %v546 = vadd.f32 %v543, %v545
        %v547 = vstv %s291
        %v548 = vmul.f32 %v514, %v547
        %v549 = vadd.f32 %v546, %v548
        %v550 = vstv %s292
        %v551 = vmul.f32 %v515, %v550
        %v552 = vadd.f32 %v549, %v551
        %v553 = vstv %s339
        %v554 = vadd.f32 %v552, %v553
        %v555 = vstv %s293
        %v556 = vmul.f32 %v512, %v555
        %v557 = vstv %s294
        %v558 = vmul.f32 %v513, %v557
        %v559 = vadd.f32 %v556, %v558
        %v560 = vstv %s295
        %v561 = vmul.f32 %v514, %v560
        %v562 = vadd.f32 %v559, %v561
        %v563 = vstv %s296
        %v564 = vmul.f32 %v515, %v563
        %v565 = vadd.f32 %v562, %v564
        %v566 = vstv %s340
        %v567 = vadd.f32 %v565, %v566
        %v568 = vmax.f32 %v528, 0.0
        %v569 = vmax.f32 %v541, 0.0
        %v570 = vmax.f32 %v554, 0.0
        %v571 = vmax.f32 %v567, 0.0
        %v572 = vstv %s297
        %v573 = vmul.f32 %v568, %v572
        %v574 = vstv %s298
        %v575 = vmul.f32 %v569, %v574
        %v576 = vadd.f32 %v573, %v575
        %v577 = vstv %s299
        %v578 = vmul.f32 %v570, %v577
        %v579 = vadd.f32 %v576, %v578
        %v580 = vstv %s300
        %v581 = vmul.f32 %v571, %v580
        %v582 = vadd.f32 %v579, %v581
        %v583 = vstv %s301
        %v584 = vmul.f32 %v512, %v583
        %v585 = vadd.f32 %v582, %v584
        %v586 = vstv %s302
        %v587 = vmul.f32 %v513, %v586
        %v588 = vadd.f32 %v585, %v587
        %v589 = vstv %s303
        %v590 = vmul.f32 %v514, %v589
        %v591 = vadd.f32 %v588, %v590
        %v592 = vstv %s304
        %v593 = vmul.f32 %v515, %v592
        %v594 = vadd.f32 %v591, %v593
        %v595 = vstv %s341
        %v596 = vadd.f32 %v594, %v595
        %v597 = vstv %s305
        %v598 = vmul.f32 %v568, %v597
        %v599 = vstv %s306
        %v600 = vmul.f32 %v569, %v599
        %v601 = vadd.f32 %v598, %v600
        %v602 = vstv %s307
        %v603 = vmul.f32 %v570, %v602
        %v604 = vadd.f32 %v601, %v603
        %v605 = vstv %s308
        %v606 = vmul.f32 %v571, %v605
        %v607 = vadd.f32 %v604, %v606
        %v608 = vstv %s309
        %v609 = vmul.f32 %v512, %v608
        %v610 = vadd.f32 %v607, %v609
        %v611 = vstv %s310
        %v612 = vmul.f32 %v513, %v611
        %v613 = vadd.f32 %v610, %v612
        %v614 = vstv %s311
        %v615 = vmul.f32 %v514, %v614
        %v616 = vadd.f32 %v613, %v615
        %v617 = vstv %s312
        %v618 = vmul.f32 %v515, %v617
        %v619 = vadd.f32 %v616, %v618
        %v620 = vstv %s342
        %v621 = vadd.f32 %v619, %v620
        %v622 = vstv %s313
        %v623 = vmul.f32 %v568, %v622
        %v624 = vstv %s314
        %v625 = vmul.f32 %v569, %v624
        %v626 = vadd.f32 %v623, %v625
        %v627 = vstv %s315
        %v628 = vmul.f32 %v570, %v627
        %v629 = vadd.f32 %v626, %v628
        %v630 = vstv %s316
        %v631 = vmul.f32 %v571, %v630
        %v632 = vadd.f32 %v629, %v631
        %v633 = vstv %s317
        %v634 = vmul.f32 %v512, %v633
        %v635 = vadd.f32 %v632, %v634
        %v636 = vstv %s318
        %v637 = vmul.f32 %v513, %v636
        %v638 = vadd.f32 %v635, %v637
        %v639 = vstv %s319
        %v640 = vmul.f32 %v514, %v639
        %v641 = vadd.f32 %v638, %v640
        %v642 = vstv %s320
        %v643 = vmul.f32 %v515, %v642
        %v644 = vadd.f32 %v641, %v643
        %v645 = vstv %s343
        %v646 = vadd.f32 %v644, %v645
        %v647 = vstv %s321
        %v648 = vmul.f32 %v568, %v647
        %v649 = vstv %s322
        %v650 = vmul.f32 %v569, %v649
        %v651 = vadd.f32 %v648, %v650
        %v652 = vstv %s323
        %v653 = vmul.f32 %v570, %v652
        %v654 = vadd.f32 %v651, %v653
        %v655 = vstv %s324
        %v656 = vmul.f32 %v571, %v655
        %v657 = vadd.f32 %v654, %v656
        %v658 = vstv %s325
        %v659 = vmul.f32 %v512, %v658
        %v660 = vadd.f32 %v657, %v659
        %v661 = vstv %s326
        %v662 = vmul.f32 %v513, %v661
        %v663 = vadd.f32 %v660, %v662
        %v664 = vstv %s327
        %v665 = vmul.f32 %v514, %v664
        %v666 = vadd.f32 %v663, %v665
        %v667 = vstv %s328
        %v668 = vmul.f32 %v515, %v667
        %v669 = vadd.f32 %v666, %v668
        %v670 = vstv %s344
        %v671 = vadd.f32 %v669, %v670
        %v672 = vmul.f32 %v596, 0.5
        %v673 = vtanh.pop %v672
        %v674 = vmul.f32 %v673, 0.5
        %v675 = vadd.f32 %v674, 0.5
        %v676 = vmul.f32 %v675, %v345
        %677 = vst [vmem:[%s232] sm:$0x3] %v676
        %v678 = vmul.f32 %v621, 0.5
        %v679 = vtanh.pop %v678
        %v680 = vmul.f32 %v679, 0.5
        %v681 = vadd.f32 %v680, 0.5
        %v682 = vmul.f32 %v681, %v347
        %s683 = scalar_lea.vmem %s232, 2 [#allocation9]
        %684 = vst [vmem:[%s683] sm:$0x3] %v682
        %v685 = vmul.f32 %v646, 0.5
        %v686 = vtanh.pop %v685
        %v687 = vmul.f32 %v686, 0.5
        %v688 = vadd.f32 %v687, 0.5
        %v689 = vmul.f32 %v688, %v349
        %s690 = scalar_lea.vmem %s232, 4 [#allocation9]
        %691 = vst [vmem:[%s690] sm:$0x3] %v689
        %v692 = vmul.f32 %v671, 0.5
        %v693 = vtanh.pop %v692
        %v694 = vmul.f32 %v693, 0.5
        %v695 = vadd.f32 %v694, 0.5
        %v696 = vmul.f32 %v695, %v351
        %s697 = scalar_lea.vmem %s232, 6 [#allocation9]
        %698 = vst [vmem:[%s697] sm:$0x3] %v696
        %s699 = sand.u32 %s114, 1
        %s700 = scalar_lea.sflag [#allocation4], %s699
        %s701 = sand.u32 %s114, 1
        %s702 = smul.addr %s701, 8
        %s703 = scalar_lea.vmem [#allocation9], %s702
        // Predicated region
        $region45: #{tpu_custom_call.1} parent=31 // pred_check
          %p704 = pneg %p124
        $region46: #{tpu_custom_call.1} parent=31 // pred_check_branch
          %706 = sbr.rel (%p704) target = $region48
        $region47: #{tpu_custom_call.1} parent=31 // pred_region
          %s708 = ssub.s32 128, 128
          %709 = vsyncadd %s700, %s708
          %s710 = smul.addr %s26, 4
          %s711 = sadd.s32 %s27, %s710
          %s712 = smul.addr %s711, 32
          %s713 = scalar_lea.hbm %s3, %s712
          %s714 = sshll.u32 %s703, 4
          %s715 = int_to_ptr.vmem [resolvable:$true] %s714
          %720 = dma.vmem_to_hbm [thread:$0]  %s715, 128, %s713, %s700, 32, 32, 2
        $region48: #{tpu_custom_call.1} parent=31 // pred_fallthru
          _
      $region32: #{tpu_custom_call.1} parent=5 // pred_fallthru
        _
      %p721 = scmp.le.s32.totalorder 2, %s17
      // Predicated region
      $region49: #{tpu_custom_call.1} parent=5 // pred_check
        %p722 = pneg %p721
      $region50: #{tpu_custom_call.1} parent=5 // pred_check_branch
        %724 = sbr.rel (%p722) target = $region52
      $region51: #{tpu_custom_call.1} parent=5 // pred_region
        %s725 = ssub.s32 %s17, 2
        // Predicated region
        $region53: #{tpu_custom_call.1} parent=51 // pred_check
          %p726 = pneg %p130
        $region54: #{tpu_custom_call.1} parent=51 // pred_check_branch
          %728 = sbr.rel (%p726) target = $region56
        $region55: #{tpu_custom_call.1} parent=51 // pred_region
          %s729 = sand.u32 %s115, 1
          %s730 = scalar_lea.sflag [#allocation4], %s729
          %s731 = sand.u32 %s115, 1
          %s732 = smul.addr %s731, 8
          %s733 = scalar_lea.vmem [#allocation9], %s732
          %734 = dma.done %s730, 128
        $region56: #{tpu_custom_call.1} parent=51 // pred_fallthru
          _
      $region52: #{tpu_custom_call.1} parent=5 // pred_fallthru
        _
    $region6: #{tpu_custom_call.1} parent=1 // loop_footer
      %s21 = sadd.s32 1, %s17
    $region7: #{tpu_custom_call.1} parent=1 // loop_footer_branch
      %16 = sbr.rel target = $region3
    $region8: #{tpu_custom_call.1} parent=1 // loop_exit
      _
    %735 = vsyncpa [#allocation3], 1
    %s736 = scalar_lea.sflag [#allocation3], 1
    %737 = vsyncpa %s736, 1
    %738 = vsyncpa [#allocation4], 1
    %s739 = scalar_lea.sflag [#allocation4], 1
    %740 = vsyncpa %s739, 1
    %741 = vsyncpa [#allocation5], 1
    %s742 = scalar_lea.sflag [#allocation5], 1
    %743 = vsyncpa %s742, 1
    %744 = vsyncpa [#allocation8], 1

</llo_original>
